<compile_context>
chip_gen: v5e
topology: v5e:2x2
jax: 0.10.0
libtpu: 0.0.40
codegen_flags: <defaults>
</compile_context>

<pallas_src>
import functools

import numpy as np
import jax
import jax.numpy as jnp
from jax import lax
from jax.experimental import pallas as pl
from jax.experimental.pallas import tpu as pltpu

EPS = 1e-5


# --------------------------------------------------------------------------- helpers
def _pick_tile(total, cap):
    """Largest multiple-of-8 divisor of `total` that is <= cap; else `total` (full)."""
    best = None
    d = 8
    limit = min(total, cap)
    while d <= limit:
        if total % d == 0:
            best = d
        d += 8
    return best if best is not None else total


def _pick_lane_tile_wo(w_out, c_out, target_lanes=256, max_lanes=4096):
    """Output-column tile so the packed lane width is 128-aligned and MXU-friendly."""
    divs = [d for d in range(1, w_out + 1) if w_out % d == 0]
    for d in divs:  # smallest divisor reaching the MXU-N target
        lanes = d * c_out
        if lanes % 128 == 0 and target_lanes <= lanes <= max_lanes:
            return d
    best = None
    for d in divs:  # else the largest 128-aligned divisor under the cap
        lanes = d * c_out
        if lanes % 128 == 0 and lanes <= max_lanes:
            best = d
    return best if best is not None else w_out


def _vmem_budget_bytes():
    """~75% of physical VMEM (64 MiB v7x, 128 MiB v5e/v6e); v7x-safe fallback."""
    try:
        cap = int(pltpu.get_tpu_info().vmem_capacity_bytes)
    except Exception:
        cap = 64 * 1024 * 1024
    return min(int(cap * 0.75), 100 * 1024 * 1024)


# --------------------------------------------------------------------------- kernels
def _conv_relu_stats_kernel(x_ref, w_ref, b_ref, y_ref, s_ref, *,
                            k, tile_h, stride, band_cols, col_step, n_wt):
    # x_ref: (1, H_pad, W_pad*C_in)        full padded image (DMA'd once per batch idx)
    # w_ref: (k, band_cols, lane_cols)     band-restricted weights (grid-invariant)
    # b_ref: (1, lane_cols)                bias, lane-interleaved (wo-major, co-minor)
    # y_ref: (1, tile_h, lane_cols)        conv + bias + ReLU tile (lane dense, f32)
    # s_ref: (1, 1, 2, lane_cols)          per-tile partial [sum ; sum-of-squares]
    t = pl.program_id(1)
    row0 = pl.multiple_of(t * (tile_h * stride), tile_h * stride)
    lanes = y_ref.shape[-1]

    if n_wt == 1:                     # single lane tile -> full-width contraction
        col_idx = slice(None)
    else:                             # band-restricted K for this lane tile
        wt = pl.program_id(2)
        col_idx = pl.ds(pl.multiple_of(wt * col_step, col_step), band_cols)

    acc = jnp.zeros((tile_h, lanes), jnp.float32)
    for kh in range(k):               # k small, statically unrolled
        if stride == 1:
            rows = x_ref[0, pl.ds(row0 + kh, tile_h), col_idx]
        else:
            rows = x_ref[0, pl.ds(row0 + kh, tile_h, stride), col_idx]
        acc = acc + jnp.dot(rows, w_ref[kh], preferred_element_type=jnp.float32)

    y = jnp.maximum(acc + b_ref[...], 0.0)          # bias + ReLU in f32
    y_ref[0] = y                                    # lane-dense, unmasked store

    # Per-tile partial statistics, written as one (2, lanes) store (no masked vst).
    # NOTE: one-pass E[y^2]-mean^2 finalize; fine at this scale, switch to a
    # Welford/Chan combine if used with very large N*H*W activations.
    s_ref[0, 0] = jnp.concatenate(
        [jnp.sum(y, axis=0, keepdims=True),
         jnp.sum(y * y, axis=0, keepdims=True)], axis=0)


def _bn_apply_kernel(y_ref, p_ref, o_ref):
    # y_ref / o_ref: (tile_rows, L)   p_ref: (2, L) = [scale ; shift]
    p = p_ref[...]
    o_ref[...] = y_ref[...] * p[0:1, :] + p[1:2, :]


# --------------------------------------------------------------------------- wrapper
@functools.partial(jax.jit, static_argnames=("stride", "padding", "current_use",
                                             "compute_dtype", "vmem_budget_bytes"))
def reusable_conv_block(x_nchw, weight, bias, gammas, betas, *,
                        stride=1, padding=0, current_use=0,
                        compute_dtype=jnp.float32,
                        vmem_budget_bytes=48 * 1024 * 1024):
    """Forward of ReusableConvBlock: Conv2d -> ReLU -> BatchNorm2d[current_use].

    x_nchw : [N, C_in, H, W]    weight : [C_out, C_in, k, k]    bias : [C_out]
    gammas / betas : [nb_use, C_out]      returns [N, C_out, H_out, W_out]
    """
    N, C_in, H, W = x_nchw.shape
    C_out, _, k, k2 = weight.shape
    assert k == k2
    H_out = (H + 2 * padding - k) // stride + 1
    W_out = (W + 2 * padding - k) // stride + 1
    L = W_out * C_out                                  # packed (wo, co) lane axis
    H_pad, W_pad = H + 2 * padding, W + 2 * padding
    f32 = jnp.float32

    # ---- static tiling decisions -------------------------------------------------
    tile_wo = _pick_lane_tile_wo(W_out, C_out)         # output-column (lane) tile
    n_wt = W_out // tile_wo
    lane_cols = tile_wo * C_out
    band_w = (tile_wo - 1) * stride + k                # receptive band for a lane tile
    band_cols = band_w * C_in
    col_step = tile_wo * stride * C_in                 # band start step (flat cols)

    in_bytes = np.dtype(compute_dtype).itemsize
    # Double-buffered fixed blocks (activation image + banded weight + small slabs).
    fixed_b = 2 * (H_pad * W_pad * C_in * in_bytes
                   + k * band_cols * lane_cols * in_bytes
                   + 3 * lane_cols * 4)
    avail = int(vmem_budget_bytes * 0.7) - fixed_b
    row_cap = max(8, avail // (2 * lane_cols * 4)) if avail > 0 else 8
    tile_h = _pick_tile(H_out, min(row_cap, 2048))     # biggest tile that fits -> M big
    n_ht = H_out // tile_h
    # v7x has 2 TCs/chip: keep at least 2 independent "parallel" grid steps.
    if N * n_ht * n_wt < 2 and tile_h % 16 == 0:
        tile_h //= 2
        n_ht = H_out // tile_h

    # ---- glue (O(input) HBM): NCHW -> padded NHWC, rows flattened to W_pad*C_in ----
    x = jnp.transpose(x_nchw, (0, 2, 3, 1)).astype(compute_dtype)
    x = jnp.pad(x, ((0, 0), (padding, padding), (padding, padding), (0, 0)))
    x2 = x.reshape(N, H_pad, W_pad * C_in)

    # ---- band-restricted weights (identical for every lane tile, built once) ------
    # B[kh, w_local*C_in+ci, wo_local*C_out+co] = W[co, ci, kh, w_local - wo_local*stride]
    w_hwio = jnp.transpose(weight.astype(f32), (2, 3, 1, 0))       # (kh, kw, C_in, C_out)
    kw_idx = np.arange(band_w)[:, None] - np.arange(tile_wo)[None, :] * stride
    valid = ((kw_idx >= 0) & (kw_idx < k)).astype(np.float32)      # (band_w, tile_wo)
    kw_idx = np.clip(kw_idx, 0, k - 1)
    band = w_hwio[:, kw_idx, :, :]                                 # (k, band_w, tile_wo, C_in, C_out)
    band = band * jnp.asarray(valid)[None, :, :, None, None]
    w_band = jnp.transpose(band, (0, 1, 3, 2, 4)).reshape(
        k, band_cols, lane_cols).astype(compute_dtype)

    bias_row = jnp.tile(bias.astype(f32), W_out).reshape(1, L)     # lane-interleaved

    cparams1 = pltpu.CompilerParams(
        dimension_semantics=("parallel", "parallel", "parallel"),
        vmem_limit_bytes=vmem_budget_bytes)

    # ---- pass 1: conv + bias + ReLU + per-tile partial BN statistics --------------
    # (w_band / bias_row are grid-invariant; pipeline_mode=pl.Buffered(1) would halve
    #  their VMEM further, but they are already small with band-restricted K.)
    y, stats = pl.pallas_call(
        functools.partial(_conv_relu_stats_kernel, k=k, tile_h=tile_h, stride=stride,
                          band_cols=band_cols, col_step=col_step, n_wt=n_wt),
        grid=(N, n_ht, n_wt),
        in_specs=[
            pl.BlockSpec((1, H_pad, W_pad * C_in), lambda n, t, wt: (n, 0, 0)),
            pl.BlockSpec((k, band_cols, lane_cols), lambda n, t, wt: (0, 0, 0)),
            pl.BlockSpec((1, lane_cols), lambda n, t, wt: (0, wt)),
        ],
        out_specs=[
            pl.BlockSpec((1, tile_h, lane_cols), lambda n, t, wt: (n, t, wt)),
            pl.BlockSpec((1, 1, 2, lane_cols), lambda n, t, wt: (n, t, 0, wt)),
        ],
        out_shape=[
            jax.ShapeDtypeStruct((N, H_out, L), f32),
            jax.ShapeDtypeStruct((N, n_ht, 2, L), f32),
        ],
        compiler_params=cparams1,
    )(x2, w_band, bias_row)

    # ---- finalize BN batch statistics (tiny cross-tile reduction, f32) ------------
    count = N * H_out * W_out
    lane_tot = jnp.sum(stats, axis=(0, 1))                          # (2, L)
    per_chan = jnp.sum(lane_tot.reshape(2, W_out, C_out), axis=1)   # (2, C_out)
    mean = per_chan[0] / count
    var = per_chan[1] / count - mean * mean                         # biased variance
    gamma = gammas[current_use].astype(f32)
    beta = betas[current_use].astype(f32)
    scale = gamma * lax.rsqrt(var + EPS)
    shift = beta - mean * scale
    params2 = jnp.stack([jnp.tile(scale, W_out), jnp.tile(shift, W_out)], axis=0)  # (2, L)
    # TODO(synk): PyTorch BatchNorm2d also updates running_mean/running_var in training
    # mode; that stateful side effect does not affect the forward output and is not
    # modeled here.

    # ---- pass 2: lane-dense normalize, big row tiles, in place --------------------
    rows_total = N * H_out
    tile_rows = _pick_tile(rows_total, min(2048, max(8, rows_total // 2)))
    y2 = y.reshape(rows_total, L)
    cparams2 = pltpu.CompilerParams(
        dimension_semantics=("parallel",), vmem_limit_bytes=vmem_budget_bytes)
    out2 = pl.pallas_call(
        _bn_apply_kernel,
        grid=(rows_total // tile_rows,),
        in_specs=[
            pl.BlockSpec((tile_rows, L), lambda r: (r, 0)),
            pl.BlockSpec((2, L), lambda r: (0, 0)),
        ],
        out_specs=pl.BlockSpec((tile_rows, L), lambda r: (r, 0)),
        out_shape=jax.ShapeDtypeStruct((rows_total, L), f32),
        input_output_aliases={0: 0},           # normalize y in place (no new HBM slab)
        compiler_params=cparams2,
    )(y2, params2)

    out = out2.reshape(N, H_out, W_out, C_out)
    return jnp.transpose(out, (0, 3, 1, 2))                         # back to NCHW


# --------------------------------------------------------------------------- reference
def _reference(x_nchw, weight, bias, gammas, betas, stride, padding, current_use):
    """Pure-JAX reference (conv -> relu -> batchnorm with batch statistics)."""
    y = lax.conv_general_dilated(
        x_nchw.astype(jnp.float32), weight.astype(jnp.float32),
        window_strides=(stride, stride),
        padding=[(padding, padding), (padding, padding)],
        dimension_numbers=("NCHW", "OIHW", "NCHW"))
    y = y + bias.reshape(1, -1, 1, 1)
    y = jnp.maximum(y, 0.0)
    mean = jnp.mean(y, axis=(0, 2, 3), keepdims=True)
    var = jnp.mean(jnp.square(y - mean), axis=(0, 2, 3), keepdims=True)
    g = gammas[current_use].reshape(1, -1, 1, 1)
    b = betas[current_use].reshape(1, -1, 1, 1)
    return g * (y - mean) * lax.rsqrt(var + EPS) + b


if __name__ == "__main__":
    # Module config: ReusableConvBlock(in_channels=4, out_channels=8,
    #                                  kernel_size=3, stride=1, padding=1, nb_use=2)
    N, C_in, H, W = 2, 4, 16, 16
    C_out, k, stride, padding, nb_use = 8, 3, 1, 1, 2
    current_use = 1

    key = jax.random.PRNGKey(0)
    kx, kw, kb = jax.random.split(key, 3)

    x = jax.random.normal(kx, (N, C_in, H, W), dtype=jnp.float32)
    weight = jax.random.normal(kw, (C_out, C_in, k, k), dtype=jnp.float32) * 0.1
    bias = jax.random.normal(kb, (C_out,), dtype=jnp.float32) * 0.1
    gammas = 1.0 + 0.1 * jnp.arange(nb_use * C_out, dtype=jnp.float32).reshape(nb_use, C_out)
    betas = 0.01 * jnp.arange(nb_use * C_out, dtype=jnp.float32).reshape(nb_use, C_out)

    # compute_dtype=jnp.bfloat16 halves activation/weight DMA on v6e/v7x (f32 accum);
    # keep f32 here for exact parity with the f32 reference.
    out = reusable_conv_block(x, weight, bias, gammas, betas,
                              stride=stride, padding=padding, current_use=current_use,
                              compute_dtype=jnp.float32,
                              vmem_budget_bytes=_vmem_budget_bytes())
    out = jax.block_until_ready(out)

    ref = _reference(x, weight, bias, gammas, betas, stride, padding, current_use)
    assert out.shape == (N, C_out, H, W), out.shape
    assert jnp.allclose(out, ref, rtol=1e-4, atol=1e-4), float(jnp.max(jnp.abs(out - ref)))

    print("KERNEL_OK")
</pallas_src>

<mosaic_0001>
module attributes {stable_mosaic.version = 11 : i64} {
  func.func @_conv_relu_stats_kernel(%arg0: i32, %arg1: i32, %arg2: i32, %arg3: memref<1x18x72xf32, #tpu.memory_space<vmem>>, %arg4: memref<3x72x128xf32, #tpu.memory_space<vmem>>, %arg5: memref<1x128xf32, #tpu.memory_space<vmem>>, %arg6: memref<1x16x128xf32, #tpu.memory_space<vmem>>, %arg7: memref<1x1x2x128xf32, #tpu.memory_space<vmem>>) attributes {dimension_semantics = [#tpu.dimension_semantics<parallel>, #tpu.dimension_semantics<parallel>, #tpu.dimension_semantics<parallel>], iteration_bounds = array<i64: 2, 1, 1>, scalar_prefetch = 0 : i64, scratch_operands = 0 : i64, tpu.core_type = #tpu.core_type<tc>, window_params = [{transform_indices = @transform_0, window_bounds = array<i64: 1, 18, 72>}, {pipeline_mode = #tpu.pipeline_mode<synchronous>, transform_indices = @transform_1, window_bounds = array<i64: 3, 72, 128>}, {transform_indices = @transform_2, window_bounds = array<i64: 1, 128>}, {transform_indices = @transform_3, window_bounds = array<i64: 1, 16, 128>}, {transform_indices = @transform_4, window_bounds = array<i64: 1, 1, 2, 128>}]} {
    %c16_i32 = arith.constant 16 : i32
    %0 = arith.muli %arg1, %c16_i32 : i32
    %1 = tpu.assume_multiple %0, 16 : i32
    %cst = arith.constant 0.000000e+00 : f32
    %2 = vector.broadcast %cst : f32 to vector<16x128xf32>
    %c0_i32 = arith.constant 0 : i32
    %3 = arith.addi %1, %c0_i32 : i32
    %c0 = arith.constant 0 : index
    %4 = arith.index_cast %3 : i32 to index
    %c0_0 = arith.constant 0 : index
    %5 = vector.load %arg3[%c0, %4, %c0_0] : memref<1x18x72xf32, #tpu.memory_space<vmem>>, vector<1x16x72xf32>
    %6 = vector.shape_cast %5 : vector<1x16x72xf32> to vector<16x72xf32>
    %c0_1 = arith.constant 0 : index
    %c0_2 = arith.constant 0 : index
    %c0_3 = arith.constant 0 : index
    %7 = vector.load %arg4[%c0_1, %c0_2, %c0_3] : memref<3x72x128xf32, #tpu.memory_space<vmem>>, vector<1x72x128xf32>
    %8 = vector.shape_cast %7 : vector<1x72x128xf32> to vector<72x128xf32>
    %cst_4 = arith.constant dense<0.000000e+00> : vector<16x128xf32>
    %9 = tpu.matmul %6, %8, %cst_4 {dimension_numbers = #tpu.dot_dimension_numbers<[1], [0], [0], [1], [0, 0, 1, 1], [], []>} : vector<16x72xf32>, vector<72x128xf32>, vector<16x128xf32> -> vector<16x128xf32>
    %10 = arith.addf %2, %9 : vector<16x128xf32>
    %c1_i32 = arith.constant 1 : i32
    %11 = arith.addi %1, %c1_i32 : i32
    %c0_5 = arith.constant 0 : index
    %12 = arith.index_cast %11 : i32 to index
    %c0_6 = arith.constant 0 : index
    %13 = vector.load %arg3[%c0_5, %12, %c0_6] : memref<1x18x72xf32, #tpu.memory_space<vmem>>, vector<1x16x72xf32>
    %14 = vector.shape_cast %13 : vector<1x16x72xf32> to vector<16x72xf32>
    %c1 = arith.constant 1 : index
    %c0_7 = arith.constant 0 : index
    %c0_8 = arith.constant 0 : index
    %15 = vector.load %arg4[%c1, %c0_7, %c0_8] : memref<3x72x128xf32, #tpu.memory_space<vmem>>, vector<1x72x128xf32>
    %16 = vector.shape_cast %15 : vector<1x72x128xf32> to vector<72x128xf32>
    %cst_9 = arith.constant dense<0.000000e+00> : vector<16x128xf32>
    %17 = tpu.matmul %14, %16, %cst_9 {dimension_numbers = #tpu.dot_dimension_numbers<[1], [0], [0], [1], [0, 0, 1, 1], [], []>} : vector<16x72xf32>, vector<72x128xf32>, vector<16x128xf32> -> vector<16x128xf32>
    %18 = arith.addf %10, %17 : vector<16x128xf32>
    %c2_i32 = arith.constant 2 : i32
    %19 = arith.addi %1, %c2_i32 : i32
    %c0_10 = arith.constant 0 : index
    %20 = arith.index_cast %19 : i32 to index
    %c0_11 = arith.constant 0 : index
    %21 = vector.load %arg3[%c0_10, %20, %c0_11] : memref<1x18x72xf32, #tpu.memory_space<vmem>>, vector<1x16x72xf32>
    %22 = vector.shape_cast %21 : vector<1x16x72xf32> to vector<16x72xf32>
    %c2 = arith.constant 2 : index
    %c0_12 = arith.constant 0 : index
    %c0_13 = arith.constant 0 : index
    %23 = vector.load %arg4[%c2, %c0_12, %c0_13] : memref<3x72x128xf32, #tpu.memory_space<vmem>>, vector<1x72x128xf32>
    %24 = vector.shape_cast %23 : vector<1x72x128xf32> to vector<72x128xf32>
    %cst_14 = arith.constant dense<0.000000e+00> : vector<16x128xf32>
    %25 = tpu.matmul %22, %24, %cst_14 {dimension_numbers = #tpu.dot_dimension_numbers<[1], [0], [0], [1], [0, 0, 1, 1], [], []>} : vector<16x72xf32>, vector<72x128xf32>, vector<16x128xf32> -> vector<16x128xf32>
    %26 = arith.addf %18, %25 : vector<16x128xf32>
    %c0_15 = arith.constant 0 : index
    %c0_16 = arith.constant 0 : index
    %27 = vector.load %arg5[%c0_15, %c0_16] : memref<1x128xf32, #tpu.memory_space<vmem>>, vector<1x128xf32>
    %28 = vector.broadcast %27 : vector<1x128xf32> to vector<16x128xf32>
    %29 = arith.addf %26, %28 : vector<16x128xf32>
    %cst_17 = arith.constant 0.000000e+00 : f32
    %30 = vector.broadcast %cst_17 : f32 to vector<16x128xf32>
    %31 = arith.maximumf %29, %30 : vector<16x128xf32>
    %c0_18 = arith.constant 0 : index
    %c0_19 = arith.constant 0 : index
    %c0_20 = arith.constant 0 : index
    %32 = vector.load %arg6[%c0_18, %c0_19, %c0_20] : memref<1x16x128xf32, #tpu.memory_space<vmem>>, vector<1x16x128xf32>
    %33 = vector.shape_cast %32 : vector<1x16x128xf32> to vector<16x128xf32>
    %34 = vector.shape_cast %31 : vector<16x128xf32> to vector<1x16x128xf32>
    tpu.vector_store %arg6[%c0_18, %c0_19, %c0_20], %34 {strides = array<i32>} : memref<1x16x128xf32, #tpu.memory_space<vmem>>, vector<1x16x128xf32>,
    %cst_21 = arith.constant dense<0.000000e+00> : vector<128xf32>
    %35 = vector.multi_reduction <add>, %31, %cst_21 [0] : vector<16x128xf32> to vector<128xf32>
    %36 = vector.shape_cast %35 : vector<128xf32> to vector<1x128xf32>
    %37 = arith.mulf %31, %31 : vector<16x128xf32>
    %cst_22 = arith.constant dense<0.000000e+00> : vector<128xf32>
    %38 = vector.multi_reduction <add>, %37, %cst_22 [0] : vector<16x128xf32> to vector<128xf32>
    %39 = vector.shape_cast %38 : vector<128xf32> to vector<1x128xf32>
    %40 = tpu.concatenate %36, %39 in 0 : vector<1x128xf32>, vector<1x128xf32> -> vector<2x128xf32>
    %c0_23 = arith.constant 0 : index
    %c0_24 = arith.constant 0 : index
    %c0_25 = arith.constant 0 : index
    %c0_26 = arith.constant 0 : index
    %41 = vector.load %arg7[%c0_23, %c0_24, %c0_25, %c0_26] : memref<1x1x2x128xf32, #tpu.memory_space<vmem>>, vector<1x1x2x128xf32>
    %42 = vector.shape_cast %41 : vector<1x1x2x128xf32> to vector<2x128xf32>
    %43 = vector.shape_cast %40 : vector<2x128xf32> to vector<1x1x2x128xf32>
    tpu.vector_store %arg7[%c0_23, %c0_24, %c0_25, %c0_26], %43 {strides = array<i32>} : memref<1x1x2x128xf32, #tpu.memory_space<vmem>>, vector<1x1x2x128xf32>,
    return
  }
  func.func @transform_0(%arg0: i32, %arg1: i32, %arg2: i32) -> (i32, i32, i32) {
    %c0_i32 = arith.constant 0 : i32
    %c0_i32_0 = arith.constant 0 : i32
    %c0_i32_1 = arith.constant 0 : i32
    return %arg0, %c0_i32, %c0_i32_0 : i32, i32, i32
  }
  func.func @transform_1(%arg0: i32, %arg1: i32, %arg2: i32) -> (i32, i32, i32) {
    %c0_i32 = arith.constant 0 : i32
    %c0_i32_0 = arith.constant 0 : i32
    %c0_i32_1 = arith.constant 0 : i32
    %c0_i32_2 = arith.constant 0 : i32
    return %c0_i32, %c0_i32_0, %c0_i32_1 : i32, i32, i32
  }
  func.func @transform_2(%arg0: i32, %arg1: i32, %arg2: i32) -> (i32, i32) {
    %c0_i32 = arith.constant 0 : i32
    %c0_i32_0 = arith.constant 0 : i32
    return %c0_i32, %arg2 : i32, i32
  }
  func.func @transform_3(%arg0: i32, %arg1: i32, %arg2: i32) -> (i32, i32, i32) {
    %c0_i32 = arith.constant 0 : i32
    return %arg0, %arg1, %arg2 : i32, i32, i32
  }
  func.func @transform_4(%arg0: i32, %arg1: i32, %arg2: i32) -> (i32, i32, i32, i32) {
    %c0_i32 = arith.constant 0 : i32
    %c0_i32_0 = arith.constant 0 : i32
    return %arg0, %arg1, %c0_i32, %arg2 : i32, i32, i32, i32
  }
}

module attributes {stable_mosaic.version = 11 : i64} {
  func.func @_bn_apply_kernel(%arg0: i32, %arg1: memref<16x128xf32, #tpu.memory_space<vmem>>, %arg2: memref<2x128xf32, #tpu.memory_space<vmem>>, %arg3: memref<16x128xf32, #tpu.memory_space<vmem>>) attributes {dimension_semantics = [#tpu.dimension_semantics<parallel>], iteration_bounds = array<i64: 2>, scalar_prefetch = 0 : i64, scratch_operands = 0 : i64, tpu.core_type = #tpu.core_type<tc>, window_params = [{transform_indices = @transform_0, window_bounds = array<i64: 16, 128>}, {pipeline_mode = #tpu.pipeline_mode<synchronous>, transform_indices = @transform_1, window_bounds = array<i64: 2, 128>}, {transform_indices = @transform_2, window_bounds = array<i64: 16, 128>}]} {
    %c0 = arith.constant 0 : index
    %c0_0 = arith.constant 0 : index
    %0 = vector.load %arg2[%c0, %c0_0] : memref<2x128xf32, #tpu.memory_space<vmem>>, vector<2x128xf32>
    %c0_1 = arith.constant 0 : index
    %c0_2 = arith.constant 0 : index
    %1 = vector.load %arg1[%c0_1, %c0_2] : memref<16x128xf32, #tpu.memory_space<vmem>>, vector<16x128xf32>
    %2 = vector.extract_strided_slice %0 {offsets = [0, 0], sizes = [1, 128], strides = [1, 1]} : vector<2x128xf32> to vector<1x128xf32>
    %3 = vector.broadcast %2 : vector<1x128xf32> to vector<16x128xf32>
    %4 = arith.mulf %1, %3 : vector<16x128xf32>
    %5 = vector.extract_strided_slice %0 {offsets = [1, 0], sizes = [1, 128], strides = [1, 1]} : vector<2x128xf32> to vector<1x128xf32>
    %6 = vector.broadcast %5 : vector<1x128xf32> to vector<16x128xf32>
    %7 = arith.addf %4, %6 : vector<16x128xf32>
    %c0_3 = arith.constant 0 : index
    %c0_4 = arith.constant 0 : index
    %8 = vector.load %arg3[%c0_3, %c0_4] : memref<16x128xf32, #tpu.memory_space<vmem>>, vector<16x128xf32>
    tpu.vector_store %arg3[%c0_3, %c0_4], %7 {strides = array<i32>} : memref<16x128xf32, #tpu.memory_space<vmem>>, vector<16x128xf32>,
    return
  }
  func.func @transform_0(%arg0: i32) -> (i32, i32) {
    %c0_i32 = arith.constant 0 : i32
    %c0_i32_0 = arith.constant 0 : i32
    return %arg0, %c0_i32 : i32, i32
  }
  func.func @transform_1(%arg0: i32) -> (i32, i32) {
    %c0_i32 = arith.constant 0 : i32
    %c0_i32_0 = arith.constant 0 : i32
    %c0_i32_1 = arith.constant 0 : i32
    return %c0_i32, %c0_i32_0 : i32, i32
  }
  func.func @transform_2(%arg0: i32) -> (i32, i32) {
    %c0_i32 = arith.constant 0 : i32
    %c0_i32_0 = arith.constant 0 : i32
    return %arg0, %c0_i32 : i32, i32
  }
}

</mosaic_0001>

<llo_original>
// kernel: tile.18
$region0: #{tile.18}
  #allocation0 [shape = 's32[1]{0}', space=sflag, size = 0x4, scoped, tag = 'scoped memory for tile.18']
  %s0 = inlined_call_operand.vmem [shape: f32[8], index: 0, kind: input, shape index: {}]
  %s1 = inlined_call_operand.vmem [shape: f32[16,8], index: 1, kind: output, shape index: {}]
  // Predicated region
  $region2: #{tile.18} parent=0 // pred_check
    _
  $region3: #{tile.18} parent=0 // pred_check_branch
    %3 = sbr.rel (0) target = $region5
  $region4: #{tile.18} parent=0 // pred_region
    _
  $region5: #{tile.18} parent=0 // pred_fallthru
    _
  %v4 = vld [vmem:[%s0] ss:$0 sm:$0xff]
  %5 = vst [vmem:[%s1] sm:$0xff] %v4
  %s6 = scalar_lea.vmem %s1, 8
  %7 = vst [vmem:[%s6] sm:$0xff] %v4

// kernel: tile.19
$region0: #{tile.19}
  %s0 = inlined_call_operand.vmem [shape: f32[16,8], index: 0, kind: input, shape index: {}]
  %s1 = inlined_call_operand.vmem [shape: f32[1,128], index: 1, kind: output, shape index: {}]
  $region1: #{tile.19} parent=0
    #allocation0 [shape = 'u8[4096]{0}', space=vmem, size = 0x1000, scoped, tag = 'scoped mem for output reshape']
    %v2 = vld [vmem:[%s0] sm:$0x1]
    %vm3 = vcmask 64512
    %4 = vst.msk [vmem:[#allocation0] sm:$0x1] %vm3, %v2
    %s5 = scalar_lea.vmem %s0, 15
    %v6 = vld [vmem:[%s5] sm:$0x1]
    %7 = vrot.lane.b32.xlu0 %v6, 120
    %v8 = vpop.permute.xlu0 %7
    %vm9 = vcmask 1048512
    %10 = vst.msk [vmem:[#allocation0] sm:$0x1] %vm9, %v8
    %s11 = scalar_lea.vmem %s0, 14
    %v12 = vld [vmem:[%s11] sm:$0x1]
    %13 = vrot.lane.b32.xlu0 %v12, 112
    %v14 = vpop.permute.xlu0 %13
    %vm15 = vcmask 982912
    %16 = vst.msk [vmem:[#allocation0] sm:$0x1] %vm15, %v14
    %s17 = scalar_lea.vmem %s0, 13
    %v18 = vld [vmem:[%s17] sm:$0x1]
    %19 = vrot.lane.b32.xlu0 %v18, 104
    %v20 = vpop.permute.xlu0 %19
    %vm21 = vcmask 917312
    %22 = vst.msk [vmem:[#allocation0] sm:$0x1] %vm21, %v20
    %s23 = scalar_lea.vmem %s0, 12
    %v24 = vld [vmem:[%s23] sm:$0x1]
    %25 = vrot.lane.b32.xlu0 %v24, 96
    %v26 = vpop.permute.xlu0 %25
    %vm27 = vcmask 851712
    %28 = vst.msk [vmem:[#allocation0] sm:$0x1] %vm27, %v26
    %s29 = scalar_lea.vmem %s0, 11
    %v30 = vld [vmem:[%s29] sm:$0x1]
    %31 = vrot.lane.b32.xlu0 %v30, 88
    %v32 = vpop.permute.xlu0 %31
    %vm33 = vcmask 786112
    %34 = vst.msk [vmem:[#allocation0] sm:$0x1] %vm33, %v32
    %s35 = scalar_lea.vmem %s0, 10
    %v36 = vld [vmem:[%s35] sm:$0x1]
    %37 = vrot.lane.b32.xlu0 %v36, 80
    %v38 = vpop.permute.xlu0 %37
    %vm39 = vcmask 720512
    %40 = vst.msk [vmem:[#allocation0] sm:$0x1] %vm39, %v38
    %s41 = scalar_lea.vmem %s0, 9
    %v42 = vld [vmem:[%s41] sm:$0x1]
    %43 = vrot.lane.b32.xlu0 %v42, 72
    %v44 = vpop.permute.xlu0 %43
    %vm45 = vcmask 654912
    %46 = vst.msk [vmem:[#allocation0] sm:$0x1] %vm45, %v44
    %s47 = scalar_lea.vmem %s0, 8
    %v48 = vld [vmem:[%s47] sm:$0x1]
    %49 = vrot.lane.b32.xlu0 %v48, 64
    %v50 = vpop.permute.xlu0 %49
    %vm51 = vcmask 589312
    %52 = vst.msk [vmem:[#allocation0] sm:$0x1] %vm51, %v50
    %s53 = scalar_lea.vmem %s0, 7
    %v54 = vld [vmem:[%s53] sm:$0x1]
    %55 = vrot.lane.b32.xlu0 %v54, 56
    %v56 = vpop.permute.xlu0 %55
    %vm57 = vcmask 523712
    %58 = vst.msk [vmem:[#allocation0] sm:$0x1] %vm57, %v56
    %s59 = scalar_lea.vmem %s0, 6
    %v60 = vld [vmem:[%s59] sm:$0x1]
    %61 = vrot.lane.b32.xlu0 %v60, 48
    %v62 = vpop.permute.xlu0 %61
    %vm63 = vcmask 458112
    %64 = vst.msk [vmem:[#allocation0] sm:$0x1] %vm63, %v62
    %s65 = scalar_lea.vmem %s0, 5
    %v66 = vld [vmem:[%s65] sm:$0x1]
    %67 = vrot.lane.b32.xlu0 %v66, 40
    %v68 = vpop.permute.xlu0 %67
    %vm69 = vcmask 392512
    %70 = vst.msk [vmem:[#allocation0] sm:$0x1] %vm69, %v68
    %s71 = scalar_lea.vmem %s0, 4
    %v72 = vld [vmem:[%s71] sm:$0x1]
    %73 = vrot.lane.b32.xlu0 %v72, 32
    %v74 = vpop.permute.xlu0 %73
    %vm75 = vcmask 326912
    %76 = vst.msk [vmem:[#allocation0] sm:$0x1] %vm75, %v74
    %s77 = scalar_lea.vmem %s0, 3
    %v78 = vld [vmem:[%s77] sm:$0x1]
    %79 = vrot.lane.b32.xlu0 %v78, 24
    %v80 = vpop.permute.xlu0 %79
    %vm81 = vcmask 261312
    %82 = vst.msk [vmem:[#allocation0] sm:$0x1] %vm81, %v80
    %s83 = scalar_lea.vmem %s0, 2
    %v84 = vld [vmem:[%s83] sm:$0x1]
    %85 = vrot.lane.b32.xlu0 %v84, 16
    %v86 = vpop.permute.xlu0 %85
    %vm87 = vcmask 195712
    %88 = vst.msk [vmem:[#allocation0] sm:$0x1] %vm87, %v86
    %s89 = scalar_lea.vmem %s0, 1
    %v90 = vld [vmem:[%s89] sm:$0x1]
    %91 = vrot.lane.b32.xlu0 %v90, 8
    %v92 = vpop.permute.xlu0 %91
    %vm93 = vcmask 130112
    %94 = vst.msk [vmem:[#allocation0] sm:$0x1] %vm93, %v92
    %s96 = ssub.s32 2, 1
    %v97 = vld [vmem:[#allocation0] sm:%s96]
    %s99 = ssub.s32 2, 1
    %100 = vst [vmem:[%s1] sm:%s99] %v97

// kernel: reusable_conv_block.2
$region0: #{reusable_conv_block.2}
  #allocation0 [shape = 'u32[]', space=smem, size = 0x4, offset = 0x4, fixed_abs, tag = 'smem constant byte address 0x4 - core index']
  #allocation1 [shape = 'u32[72,128]{1,0:T(1,128)}', space=vmem, size = 0x9000, scoped, tag = 'internal scratch']
  %s0 = inlined_call_operand.vmem [shape: f32[2,18,72], index: 0, kind: input, shape index: {}]
  %s1 = inlined_call_operand.vmem [shape: f32[3,72,128], index: 1, kind: input, shape index: {}]
  %s2 = inlined_call_operand.vmem [shape: f32[1,128], index: 2, kind: input, shape index: {}]
  %s3 = inlined_call_operand.vmem [shape: f32[2,16,128], index: 3, kind: output, shape index: {0}]
  %s4 = inlined_call_operand.vmem [shape: f32[2,1,2,128], index: 4, kind: output, shape index: {1}]
  %5 = xla_tuple %s3, %s4
  %s6 = sld [smem:[#allocation0]]
  $region53: #{reusable_conv_block.2} parent=0
    _
  %s8 = ssub.s32 1, %s6
  %s9 = scalar_select 0, %s8, %s6
  loop: start=0, step=1, limit=4
  $region2: #{reusable_conv_block.2} parent=0 // loop_pre_header
    _
  $region3: #{reusable_conv_block.2} parent=0 // loop_header
    %s11 = sphi 0, %s15
    %p12 = scmp.ge.s32.totalorder %s11, 4
    %s18 = sphi 0, %s37
    %s19 = sphi 0, %s33
    %s20 = sphi 0, %s29
    %s21 = sphi 0, %s18
    %s22 = sphi 0, %s19
    %s23 = sphi 0, %s20
    %s24 = sphi 0, %s21
    %s25 = sphi 0, %s22
    %s26 = sphi 0, %s23
    %s40 = sphi 0, %s42
    %s43 = sphi 0, %s40
    %s44 = sphi 0, %s43
    %s60 = sphi 0, %s44
    %s64 = sphi 0, %s64
    %s66 = sphi 0, %s64
    %s67 = sphi 0, %s66
    %s81 = sphi 0, %s67
    %s87 = sphi 0, %s89
    %s90 = sphi 0, %s87
    %s91 = sphi 0, %s90
    %s107 = sphi 0, %s91
    %s117 = sphi 0, %s119
    %s120 = sphi 0, %s117
    %s121 = sphi 0, %s120
    %s137 = sphi 0, %s121
    %s147 = sphi 0, %s149
    %s150 = sphi 0, %s147
    %s151 = sphi 0, %s150
    %s167 = sphi 0, %s151
  $region4: #{reusable_conv_block.2} parent=0 // loop_header_branch
    %14 = sbr.rel (%p12) target = $region8
  $region5: #{reusable_conv_block.2} parent=0 // loop_body
    %s16 = ssub.s32 %s11, 1
    %s17 = ssub.s32 %s11, 2
    %s27 = sadd.s32 1, %s20
    %p28 = scmp.ge.s32.totalorder %s27, 1
    %s29 = scalar_select %p28, 0, %s27
    %s30 = sadd.s32 1, %s19
    %s31 = scalar_select %p28, %s30, %s19
    %p32 = scmp.ge.s32.totalorder %s31, 1
    %s33 = scalar_select %p32, 0, %s31
    %s34 = sadd.s32 1, %s18
    %s35 = scalar_select %p32, %s34, %s18
    %p36 = scmp.ge.s32.totalorder %s35, 2
    %s37 = scalar_select %p36, 0, %s35
    %s38 = ssub.s32 %s18, %s37
    %p39 = scmp.eq.s32.totalorder %s38, 0
    %s41 = sadd.s32 %s40, 1
    %s42 = scalar_select %p39, %s40, %s41
    %p45 = pneg %p39
    %p46 = scmp.eq.s32.totalorder %s11, 1
    %p47 = por %p45, %p46
    %p48 = scmp.ne.s32.totalorder %s40, %s43
    %p49 = scmp.eq.s32.totalorder %s11, 0
    %p50 = por %p48, %p49
    %p51 = scmp.ne.s32.totalorder %s40, %s43
    %p52 = scmp.eq.s32.totalorder %s16, 1
    %p53 = por %p51, %p52
    %p54 = scmp.ne.s32.totalorder %s43, %s44
    %p55 = scmp.eq.s32.totalorder %s16, 0
    %p56 = por %p54, %p55
    %p57 = scmp.ne.s32.totalorder %s43, %s44
    %p58 = scmp.eq.s32.totalorder %s17, 1
    %p59 = por %p57, %p58
    %p61 = scmp.ne.s32.totalorder %s44, %s60
    %p62 = scmp.eq.s32.totalorder %s17, 0
    %p63 = por %p61, %p62
    %s65 = sadd.s32 %s64, 1
    %p68 = scmp.eq.s32.totalorder %s11, 1
    %p69 = scmp.ne.s32.totalorder %s64, %s66
    %p70 = scmp.eq.s32.totalorder %s11, 0
    %p71 = por %p69, %p70
    %p72 = scmp.ne.s32.totalorder %s64, %s66
    %p73 = scmp.eq.s32.totalorder %s16, 1
    %p74 = por %p72, %p73
    %p75 = scmp.ne.s32.totalorder %s66, %s67
    %p76 = scmp.eq.s32.totalorder %s16, 0
    %p77 = por %p75, %p76
    %p78 = scmp.ne.s32.totalorder %s66, %s67
    %p79 = scmp.eq.s32.totalorder %s17, 1
    %p80 = por %p78, %p79
    %p82 = scmp.ne.s32.totalorder %s67, %s81
    %p83 = scmp.eq.s32.totalorder %s17, 0
    %p84 = por %p82, %p83
    %s85 = ssub.s32 %s20, %s29
    %p86 = scmp.eq.s32.totalorder %s85, 0
    %s88 = sadd.s32 %s87, 1
    %s89 = scalar_select %p86, %s87, %s88
    %p92 = pneg %p86
    %p93 = scmp.eq.s32.totalorder %s11, 1
    %p94 = por %p92, %p93
    %p95 = scmp.ne.s32.totalorder %s87, %s90
    %p96 = scmp.eq.s32.totalorder %s11, 0
    %p97 = por %p95, %p96
    %p98 = scmp.ne.s32.totalorder %s87, %s90
    %p99 = scmp.eq.s32.totalorder %s16, 1
    %p100 = por %p98, %p99
    %p101 = scmp.ne.s32.totalorder %s90, %s91
    %p102 = scmp.eq.s32.totalorder %s16, 0
    %p103 = por %p101, %p102
    %p104 = scmp.ne.s32.totalorder %s90, %s91
    %p105 = scmp.eq.s32.totalorder %s17, 1
    %p106 = por %p104, %p105
    %p108 = scmp.ne.s32.totalorder %s91, %s107
    %p109 = scmp.eq.s32.totalorder %s17, 0
    %p110 = por %p108, %p109
    %s111 = ssub.s32 %s18, %s37
    %s112 = ssub.s32 %s19, %s33
    %s113 = sor.u32 %s111, %s112
    %s114 = ssub.s32 %s20, %s29
    %s115 = sor.u32 %s113, %s114
    %p116 = scmp.eq.s32.totalorder %s115, 0
    %s118 = sadd.s32 %s117, 1
    %s119 = scalar_select %p116, %s117, %s118
    %p122 = pneg %p116
    %p123 = scmp.eq.s32.totalorder %s11, 1
    %p124 = por %p122, %p123
    %p125 = scmp.ne.s32.totalorder %s117, %s120
    %p126 = scmp.eq.s32.totalorder %s11, 0
    %p127 = por %p125, %p126
    %p128 = scmp.ne.s32.totalorder %s117, %s120
    %p129 = scmp.eq.s32.totalorder %s16, 1
    %p130 = por %p128, %p129
    %p131 = scmp.ne.s32.totalorder %s120, %s121
    %p132 = scmp.eq.s32.totalorder %s16, 0
    %p133 = por %p131, %p132
    %p134 = scmp.ne.s32.totalorder %s120, %s121
    %p135 = scmp.eq.s32.totalorder %s17, 1
    %p136 = por %p134, %p135
    %p138 = scmp.ne.s32.totalorder %s121, %s137
    %p139 = scmp.eq.s32.totalorder %s17, 0
    %p140 = por %p138, %p139
    %s141 = ssub.s32 %s18, %s37
    %s142 = ssub.s32 %s19, %s33
    %s143 = sor.u32 %s141, %s142
    %s144 = ssub.s32 %s20, %s29
    %s145 = sor.u32 %s143, %s144
    %p146 = scmp.eq.s32.totalorder %s145, 0
    %s148 = sadd.s32 %s147, 1
    %s149 = scalar_select %p146, %s147, %s148
    %p152 = pneg %p146
    %p153 = scmp.eq.s32.totalorder %s11, 1
    %p154 = por %p152, %p153
    %p155 = scmp.ne.s32.totalorder %s147, %s150
    %p156 = scmp.eq.s32.totalorder %s11, 0
    %p157 = por %p155, %p156
    %p158 = scmp.ne.s32.totalorder %s147, %s150
    %p159 = scmp.eq.s32.totalorder %s16, 1
    %p160 = por %p158, %p159
    %p161 = scmp.ne.s32.totalorder %s150, %s151
    %p162 = scmp.eq.s32.totalorder %s16, 0
    %p163 = por %p161, %p162
    %p164 = scmp.ne.s32.totalorder %s150, %s151
    %p165 = scmp.eq.s32.totalorder %s17, 1
    %p166 = por %p164, %p165
    %p168 = scmp.ne.s32.totalorder %s151, %s167
    %p169 = scmp.eq.s32.totalorder %s17, 0
    %p170 = por %p168, %p169
    %p171 = scmp.le.s32.totalorder 1, %s11
    %p172 = scmp.lt.s32.totalorder %s11, 3
    %p173 = pnand %p171, %p172
    %p174 = pneg %p173
    // Predicated region
    $region9: #{reusable_conv_block.2} parent=5 // pred_check
      _
    $region10: #{reusable_conv_block.2} parent=5 // pred_check_branch
      %176 = sbr.rel (%p173) target = $region12
    $region11: #{reusable_conv_block.2} parent=5 // pred_region
      %s177 = ssub.s32 %s11, 1
      // Predicated region
      $region13: #{reusable_conv_block.2} parent=11 // pred_check
        %p178 = pneg %p77
      $region14: #{reusable_conv_block.2} parent=11 // pred_check_branch
        %180 = sbr.rel (%p178) target = $region16
      $region15: #{reusable_conv_block.2} parent=11 // pred_region
        _
      $region16: #{reusable_conv_block.2} parent=11 // pred_fallthru
        _
      // Predicated region
      $region17: #{reusable_conv_block.2} parent=11 // pred_check
        %p181 = pneg %p103
      $region18: #{reusable_conv_block.2} parent=11 // pred_check_branch
        %183 = sbr.rel (%p181) target = $region20
      $region19: #{reusable_conv_block.2} parent=11 // pred_region
        %p184 = scmp.lt.s32.totalorder %s23, 0
        %s185 = scalar_select %p184, %s23, 0
        %s186 = scalar_lea.vmem %s2, %s185
      $region20: #{reusable_conv_block.2} parent=11 // pred_fallthru
        _
    $region12: #{reusable_conv_block.2} parent=5 // pred_fallthru
      _
    %p187 = scmp.lt.s32.totalorder %s11, 2
    // Predicated region
    $region21: #{reusable_conv_block.2} parent=5 // pred_check
      %p188 = pneg %p187
    $region22: #{reusable_conv_block.2} parent=5 // pred_check_branch
      %190 = sbr.rel (%p188) target = $region24
    $region23: #{reusable_conv_block.2} parent=5 // pred_region
      // Predicated region
      $region25: #{reusable_conv_block.2} parent=23 // pred_check
        %p191 = pneg %p50
      $region26: #{reusable_conv_block.2} parent=23 // pred_check_branch
        %193 = sbr.rel (%p191) target = $region28
      $region27: #{reusable_conv_block.2} parent=23 // pred_region
        %p194 = scmp.lt.s32.totalorder %s18, 1
        %s195 = scalar_select %p194, %s18, 1
        %s196 = smul.addr %s195, 3
        %s197 = smul.addr %s196, 8
        %s198 = scalar_lea.vmem %s0, %s197
      $region28: #{reusable_conv_block.2} parent=23 // pred_fallthru
        _
    $region24: #{reusable_conv_block.2} parent=5 // pred_fallthru
      _
    %p199 = scmp.le.s32.totalorder 1, %s11
    %p200 = scmp.lt.s32.totalorder %s11, 3
    %p201 = pnand %p199, %p200
    %p202 = pneg %p201
    // Predicated region
    $region29: #{reusable_conv_block.2} parent=5 // pred_check
      _
    $region30: #{reusable_conv_block.2} parent=5 // pred_check_branch
      %204 = sbr.rel (%p201) target = $region32
    $region31: #{reusable_conv_block.2} parent=5 // pred_region
      %s205 = ssub.s32 %s11, 1
      %p206 = scmp.lt.s32.totalorder %s21, 1
      %s207 = scalar_select %p206, %s21, 1
      %s208 = smul.addr %s207, 3
      %s209 = smul.addr %s208, 8
      %s210 = scalar_lea.vmem %s0, %s209
      %p211 = pneg %p56
      %p212 = pneg %p53
      %p213 = pneg %p77
      %p214 = pneg %p74
      %p215 = scmp.lt.s32.totalorder %s23, 0
      %s216 = scalar_select %p215, %s23, 0
      %s217 = scalar_lea.vmem %s2, %s216
      %p218 = pneg %p103
      %p219 = pneg %p100
      %p220 = pneg %p133
      %p221 = pneg %p130
      %s222 = smul.u32 2, %s22
      %p223 = scmp.lt.s32.totalorder %s21, 1
      %s224 = scalar_select %p223, %s21, 1
      %p225 = scmp.lt.s32.totalorder %s222, 1
      %s226 = scalar_select %p225, %s222, 1
      %p227 = scmp.lt.s32.totalorder %s23, 0
      %s228 = scalar_select %p227, %s23, 0
      %s229 = sadd.s32 %s228, %s226
      %s230 = smul.addr %s224, 2
      %s231 = sadd.s32 %s229, %s230
      %s232 = smul.addr %s231, 8
      %s233 = scalar_lea.vmem %s3, %s232
      %p234 = pneg %p163
      %p235 = pneg %p160
      %p236 = scmp.lt.s32.totalorder %s21, 1
      %s237 = scalar_select %p236, %s21, 1
      %p238 = scmp.lt.s32.totalorder %s22, 0
      %s239 = scalar_select %p238, %s22, 0
      %p240 = scmp.lt.s32.totalorder %s23, 0
      %s241 = scalar_select %p240, %s23, 0
      %s242 = sadd.s32 %s241, %s239
      %s243 = sadd.s32 %s242, %s237
      %s244 = smul.addr %s243, 2
      %s245 = scalar_lea.vmem %s4, %s244
      %p246 = scmp.lt.s32.totalorder %s21, 1
      %s247 = scalar_select %p246, %s21, 1
      %s248 = smul.addr %s247, 3
      %s249 = smul.addr %s248, 8
      %s250 = scalar_lea.vmem %s0, %s249
      %p251 = scmp.lt.s32.totalorder %s23, 0
      %s252 = scalar_select %p251, %s23, 0
      %s253 = scalar_lea.vmem %s2, %s252
      %s254 = smul.u32 2, %s22
      %p255 = scmp.lt.s32.totalorder %s21, 1
      %s256 = scalar_select %p255, %s21, 1
      %p257 = scmp.lt.s32.totalorder %s254, 1
      %s258 = scalar_select %p257, %s254, 1
      %p259 = scmp.lt.s32.totalorder %s23, 0
      %s260 = scalar_select %p259, %s23, 0
      %s261 = sadd.s32 %s260, %s258
      %s262 = smul.addr %s256, 2
      %s263 = sadd.s32 %s261, %s262
      %s264 = smul.addr %s263, 8
      %s265 = scalar_lea.vmem %s3, %s264
      %s266 = smul.u32 2, %s22
      %p267 = scmp.lt.s32.totalorder %s21, 1
      %s268 = scalar_select %p267, %s21, 1
      %p269 = scmp.lt.s32.totalorder %s22, 0
      %s270 = scalar_select %p269, %s22, 0
      %p271 = scmp.lt.s32.totalorder %s23, 0
      %s272 = scalar_select %p271, %s23, 0
      %s273 = sadd.s32 %s272, %s270
      %s274 = sadd.s32 %s273, %s268
      %s275 = smul.addr %s274, 2
      %s276 = scalar_lea.vmem %s4, %s275
      %s277 = smul.u32 %s22, 16
      %s278 = scalar_lea.vmem %s250, %s277
      %v279 = vld [vmem:[%s278] sm:$0xff]
      %v280 = vld [vmem:[%s278 + $0x8] sm:$0xff]
      %v281 = vld [vmem:[%s1] sm:$0xff]
      %v282 = vld [vmem:[%s1 + $0x8] sm:$0xff]
      %v283 = vld [vmem:[%s1 + $0x10] sm:$0xff]
      %v284 = vld [vmem:[%s1 + $0x18] sm:$0xff]
      %v285 = vld [vmem:[%s1 + $0x20] sm:$0xff]
      %v286 = vld [vmem:[%s1 + $0x28] sm:$0xff]
      %v287 = vld [vmem:[%s1 + $0x30] sm:$0xff]
      %v288 = vld [vmem:[%s1 + $0x38] sm:$0xff]
      %v289 = vld [vmem:[%s1 + $0x40] sm:$0xff]
      %s290 = sadd.s32 %s277, 1
      %s291 = scalar_lea.vmem %s250, %s290
      %v292 = vld [vmem:[%s291] sm:$0xff]
      %v293 = vld [vmem:[%s291 + $0x8] sm:$0xff]
      %s294 = scalar_lea.vmem %s1, 72
      %v295 = vld [vmem:[%s294] sm:$0xff]
      %v296 = vld [vmem:[%s294 + $0x8] sm:$0xff]
      %v297 = vld [vmem:[%s294 + $0x10] sm:$0xff]
      %v298 = vld [vmem:[%s294 + $0x18] sm:$0xff]
      %v299 = vld [vmem:[%s294 + $0x20] sm:$0xff]
      %v300 = vld [vmem:[%s294 + $0x28] sm:$0xff]
      %v301 = vld [vmem:[%s294 + $0x30] sm:$0xff]
      %v302 = vld [vmem:[%s294 + $0x38] sm:$0xff]
      %v303 = vld [vmem:[%s294 + $0x40] sm:$0xff]
      %vm304 = vcmask 588800
      %v306 = vsel %vm304, %v292, 0
      %v309 = vsel %vm304, %v293, 0
      %311 = vmatpush.msra.mxu0 0.0
      %312 = vmatpush.msra.mxu0 0.0
      %313 = vmatpush.msra.mxu0 0.0
      %314 = vmatpush.msra.mxu0 0.0
      %315 = vmatpush.msra.mxu0 0.0
      %316 = vmatpush.msra.mxu0 0.0
      %317 = vmatpush.msra.mxu0 0.0
      %318 = vmatpush.msra.mxu0 %v303
      %319 = vmatpush.msra.mxu0 %v302
      %320 = vmatpush.msra.mxu0 %v301
      %321 = vmatpush.msra.mxu0 %v300
      %322 = vmatpush.msra.mxu0 %v299
      %323 = vmatpush.msra.mxu0 %v298
      %324 = vmatpush.msra.mxu0 %v297
      %325 = vmatpush.msra.mxu0 %v296
      %326 = vmatpush.msra.mxu0 %v295
      %327 = vmatmul.f32.gmra.mxu0 %v306
      %v328 = vpop.f32.mrf.mxu0
      %v329 = vadd.f32 0.0, %v328
      %330 = vmatmul.f32.gmra.mxu0 %v309
      %v331 = vpop.f32.mrf.mxu0
      %v332 = vadd.f32 0.0, %v331
      %333 = vdwg.mxu0
      %v335 = vsel %vm304, %v279, 0
      %v338 = vsel %vm304, %v280, 0
      %340 = vmatpush.msra.mxu0 0.0
      %341 = vmatpush.msra.mxu0 0.0
      %342 = vmatpush.msra.mxu0 0.0
      %343 = vmatpush.msra.mxu0 0.0
      %344 = vmatpush.msra.mxu0 0.0
      %345 = vmatpush.msra.mxu0 0.0
      %346 = vmatpush.msra.mxu0 0.0
      %347 = vmatpush.msra.mxu0 %v289
      %348 = vmatpush.msra.mxu0 %v288
      %349 = vmatpush.msra.mxu0 %v287
      %350 = vmatpush.msra.mxu0 %v286
      %351 = vmatpush.msra.mxu0 %v285
      %352 = vmatpush.msra.mxu0 %v284
      %353 = vmatpush.msra.mxu0 %v283
      %354 = vmatpush.msra.mxu0 %v282
      %355 = vmatpush.msra.mxu0 %v281
      %356 = vmatmul.f32.gmra.mxu0 %v335
      %v357 = vpop.f32.mrf.mxu0
      %v358 = vadd.f32 %v329, %v357
      %359 = vmatmul.f32.gmra.mxu0 %v338
      %v360 = vpop.f32.mrf.mxu0
      %v361 = vadd.f32 %v332, %v360
      %362 = vdwg.mxu0
      %s363 = sadd.s32 %s277, 2
      %s364 = scalar_lea.vmem %s250, %s363
      %v365 = vld [vmem:[%s364] sm:$0xff]
      %v366 = vld [vmem:[%s364 + $0x8] sm:$0xff]
      %s367 = scalar_lea.vmem %s1, 144
      %v368 = vld [vmem:[%s367] sm:$0xff]
      %v369 = vld [vmem:[%s367 + $0x8] sm:$0xff]
      %v370 = vld [vmem:[%s367 + $0x10] sm:$0xff]
      %v371 = vld [vmem:[%s367 + $0x18] sm:$0xff]
      %v372 = vld [vmem:[%s367 + $0x20] sm:$0xff]
      %v373 = vld [vmem:[%s367 + $0x28] sm:$0xff]
      %v374 = vld [vmem:[%s367 + $0x30] sm:$0xff]
      %v375 = vld [vmem:[%s367 + $0x38] sm:$0xff]
      %v376 = vld [vmem:[%s367 + $0x40] sm:$0xff]
      %v378 = vsel %vm304, %v365, 0
      %v381 = vsel %vm304, %v366, 0
      %383 = vmatpush.msra.mxu0 0.0
      %384 = vmatpush.msra.mxu0 0.0
      %385 = vmatpush.msra.mxu0 0.0
      %386 = vmatpush.msra.mxu0 0.0
      %387 = vmatpush.msra.mxu0 0.0
      %388 = vmatpush.msra.mxu0 0.0
      %389 = vmatpush.msra.mxu0 0.0
      %390 = vmatpush.msra.mxu0 %v376
      %391 = vmatpush.msra.mxu0 %v375
      %392 = vmatpush.msra.mxu0 %v374
      %393 = vmatpush.msra.mxu0 %v373
      %394 = vmatpush.msra.mxu0 %v372
      %395 = vmatpush.msra.mxu0 %v371
      %396 = vmatpush.msra.mxu0 %v370
      %397 = vmatpush.msra.mxu0 %v369
      %398 = vmatpush.msra.mxu0 %v368
      %399 = vmatmul.f32.gmra.mxu0 %v378
      %v400 = vpop.f32.mrf.mxu0
      %v401 = vadd.f32 0.0, %v400
      %402 = vmatmul.f32.gmra.mxu0 %v381
      %v403 = vpop.f32.mrf.mxu0
      %v404 = vadd.f32 0.0, %v403
      %405 = vdwg.mxu0
      %v406 = vadd.f32 %v358, %v401
      %v407 = vadd.f32 %v361, %v404
      %v408 = vld [vmem:[%s253] sm:$0x1]
      %v410 = vperm.slane %v408, 0
      %v412 = vadd.f32 %v406, %v410
      %v413 = vadd.f32 %v407, %v410
      %v414 = vmax.f32 %v412, 0.0
      %v415 = vmax.f32 %v413, 0.0
      %416 = vst [vmem:[%s265] sm:$0xff] %v414
      %417 = vst [vmem:[%s265 + $0x8] sm:$0xff] %v415
      %v418 = vadd.f32 %v414, %v415
      %v419 = vrot.slane %v418, 4
      %v420 = vadd.f32 %v418, %v419
      %v421 = vrot.slane %v420, 2
      %v422 = vadd.f32 %v420, %v421
      %v423 = vrot.slane %v422, 1
      %v424 = vadd.f32 %v422, %v423
      %v425 = vmul.f32 %v414, %v414
      %v426 = vmul.f32 %v415, %v415
      %v427 = vadd.f32 %v425, %v426
      %v428 = vrot.slane %v427, 4
      %v429 = vadd.f32 %v427, %v428
      %v430 = vrot.slane %v429, 2
      %v431 = vadd.f32 %v429, %v430
      %v432 = vrot.slane %v431, 1
      %v433 = vadd.f32 %v431, %v432
      %vm434 = vcmask 1040384
      %v435 = vsel %vm434, %v424, %v433
      %436 = vst [vmem:[%s276] sm:$0x3] %v435
      %s437 = smul.u32 2, %s22
      %p438 = scmp.lt.s32.totalorder %s21, 1
      %s439 = scalar_select %p438, %s21, 1
      %p440 = scmp.lt.s32.totalorder %s437, 1
      %s441 = scalar_select %p440, %s437, 1
      %p442 = scmp.lt.s32.totalorder %s23, 0
      %s443 = scalar_select %p442, %s23, 0
      %s444 = sadd.s32 %s443, %s441
      %s445 = smul.addr %s439, 2
      %s446 = sadd.s32 %s444, %s445
      %s447 = smul.addr %s446, 8
      %s448 = scalar_lea.vmem %s3, %s447
      %p449 = scmp.lt.s32.totalorder %s21, 1
      %s450 = scalar_select %p449, %s21, 1
      %p451 = scmp.lt.s32.totalorder %s22, 0
      %s452 = scalar_select %p451, %s22, 0
      %p453 = scmp.lt.s32.totalorder %s23, 0
      %s454 = scalar_select %p453, %s23, 0
      %s455 = sadd.s32 %s454, %s452
      %s456 = sadd.s32 %s455, %s450
      %s457 = smul.addr %s456, 2
      %s458 = scalar_lea.vmem %s4, %s457
      // Predicated region
      $region33: #{reusable_conv_block.2} parent=31 // pred_check
        %p459 = pneg %p130
      $region34: #{reusable_conv_block.2} parent=31 // pred_check_branch
        %461 = sbr.rel (%p459) target = $region36
      $region35: #{reusable_conv_block.2} parent=31 // pred_region
        %s462 = smul.u32 2, %s22
      $region36: #{reusable_conv_block.2} parent=31 // pred_fallthru
        _
      // Predicated region
      $region37: #{reusable_conv_block.2} parent=31 // pred_check
        %p463 = pneg %p160
      $region38: #{reusable_conv_block.2} parent=31 // pred_check_branch
        %465 = sbr.rel (%p463) target = $region40
      $region39: #{reusable_conv_block.2} parent=31 // pred_region
        _
      $region40: #{reusable_conv_block.2} parent=31 // pred_fallthru
        _
    $region32: #{reusable_conv_block.2} parent=5 // pred_fallthru
      _
    %p466 = scmp.le.s32.totalorder 2, %s11
    // Predicated region
    $region41: #{reusable_conv_block.2} parent=5 // pred_check
      %p467 = pneg %p466
    $region42: #{reusable_conv_block.2} parent=5 // pred_check_branch
      %469 = sbr.rel (%p467) target = $region44
    $region43: #{reusable_conv_block.2} parent=5 // pred_region
      %s470 = ssub.s32 %s11, 2
      // Predicated region
      $region45: #{reusable_conv_block.2} parent=43 // pred_check
        %p471 = pneg %p136
      $region46: #{reusable_conv_block.2} parent=43 // pred_check_branch
        %473 = sbr.rel (%p471) target = $region48
      $region47: #{reusable_conv_block.2} parent=43 // pred_region
        %s474 = smul.u32 2, %s25
        %p475 = scmp.lt.s32.totalorder %s24, 1
        %s476 = scalar_select %p475, %s24, 1
        %p477 = scmp.lt.s32.totalorder %s474, 1
        %s478 = scalar_select %p477, %s474, 1
        %p479 = scmp.lt.s32.totalorder %s26, 0
        %s480 = scalar_select %p479, %s26, 0
        %s481 = sadd.s32 %s480, %s478
        %s482 = smul.addr %s476, 2
        %s483 = sadd.s32 %s481, %s482
        %s484 = smul.addr %s483, 8
        %s485 = scalar_lea.vmem %s3, %s484
      $region48: #{reusable_conv_block.2} parent=43 // pred_fallthru
        _
      // Predicated region
      $region49: #{reusable_conv_block.2} parent=43 // pred_check
        %p486 = pneg %p166
      $region50: #{reusable_conv_block.2} parent=43 // pred_check_branch
        %488 = sbr.rel (%p486) target = $region52
      $region51: #{reusable_conv_block.2} parent=43 // pred_region
        %p489 = scmp.lt.s32.totalorder %s24, 1
        %s490 = scalar_select %p489, %s24, 1
        %p491 = scmp.lt.s32.totalorder %s25, 0
        %s492 = scalar_select %p491, %s25, 0
        %p493 = scmp.lt.s32.totalorder %s26, 0
        %s494 = scalar_select %p493, %s26, 0
        %s495 = sadd.s32 %s494, %s492
        %s496 = sadd.s32 %s495, %s490
        %s497 = smul.addr %s496, 2
        %s498 = scalar_lea.vmem %s4, %s497
      $region52: #{reusable_conv_block.2} parent=43 // pred_fallthru
        _
    $region44: #{reusable_conv_block.2} parent=5 // pred_fallthru
      _
  $region6: #{reusable_conv_block.2} parent=0 // loop_footer
    %s15 = sadd.s32 1, %s11
  $region7: #{reusable_conv_block.2} parent=0 // loop_footer_branch
    %10 = sbr.rel target = $region3
  $region8: #{reusable_conv_block.2} parent=0 // loop_exit
    _

// kernel: reusable_conv_block.3
$region0: #{reusable_conv_block.3}
  #allocation0 [shape = 'u32[]', space=smem, size = 0x4, offset = 0x4, fixed_abs, tag = 'smem constant byte address 0x4 - core index']
  #allocation1 [shape = 'u32[72,128]{1,0:T(1,128)}', space=vmem, size = 0x9000, scoped, tag = 'internal scratch']
  %s0 = inlined_call_operand.vmem [shape: f32[32,128], index: 0, kind: input, shape index: {}, may-alias: {0,2}]
  %s1 = inlined_call_operand.vmem [shape: f32[2,128], index: 1, kind: input, shape index: {}]
  %s2 = inlined_call_operand.vmem [shape: f32[32,128], index: 2, kind: output, shape index: {}, may-alias: {0,2}]
  %s3 = sld [smem:[#allocation0]]
  $region41: #{reusable_conv_block.3} parent=0
    _
  %s5 = ssub.s32 1, %s3
  %s6 = scalar_select 0, %s5, %s3
  loop: start=0, step=1, limit=4
  $region2: #{reusable_conv_block.3} parent=0 // loop_pre_header
    _
  $region3: #{reusable_conv_block.3} parent=0 // loop_header
    %s8 = sphi 0, %s12
    %p9 = scmp.ge.s32.totalorder %s8, 4
    %s18 = sphi 0, %s20
    %s21 = sphi 0, %s18
    %s22 = sphi 0, %s21
    %s38 = sphi 0, %s22
    %s42 = sphi 0, %s42
    %s44 = sphi 0, %s42
    %s45 = sphi 0, %s44
    %s59 = sphi 0, %s45
    %s65 = sphi 0, %s67
    %s68 = sphi 0, %s65
    %s69 = sphi 0, %s68
    %s85 = sphi 0, %s69
  $region4: #{reusable_conv_block.3} parent=0 // loop_header_branch
    %11 = sbr.rel (%p9) target = $region8
  $region5: #{reusable_conv_block.3} parent=0 // loop_body
    %s13 = ssub.s32 %s8, 1
    %s14 = ssub.s32 %s8, 2
    %s15 = sadd.s32 %s8, 1
    %s16 = ssub.s32 %s8, %s15
    %p17 = scmp.eq.s32.totalorder %s16, 0
    %s19 = sadd.s32 %s18, 1
    %s20 = scalar_select %p17, %s18, %s19
    %p23 = pneg %p17
    %p24 = scmp.eq.s32.totalorder %s8, 1
    %p25 = por %p23, %p24
    %p26 = scmp.ne.s32.totalorder %s18, %s21
    %p27 = scmp.eq.s32.totalorder %s8, 0
    %p28 = por %p26, %p27
    %p29 = scmp.ne.s32.totalorder %s18, %s21
    %p30 = scmp.eq.s32.totalorder %s13, 1
    %p31 = por %p29, %p30
    %p32 = scmp.ne.s32.totalorder %s21, %s22
    %p33 = scmp.eq.s32.totalorder %s13, 0
    %p34 = por %p32, %p33
    %p35 = scmp.ne.s32.totalorder %s21, %s22
    %p36 = scmp.eq.s32.totalorder %s14, 1
    %p37 = por %p35, %p36
    %p39 = scmp.ne.s32.totalorder %s22, %s38
    %p40 = scmp.eq.s32.totalorder %s14, 0
    %p41 = por %p39, %p40
    %s43 = sadd.s32 %s42, 1
    %p46 = scmp.eq.s32.totalorder %s8, 1
    %p47 = scmp.ne.s32.totalorder %s42, %s44
    %p48 = scmp.eq.s32.totalorder %s8, 0
    %p49 = por %p47, %p48
    %p50 = scmp.ne.s32.totalorder %s42, %s44
    %p51 = scmp.eq.s32.totalorder %s13, 1
    %p52 = por %p50, %p51
    %p53 = scmp.ne.s32.totalorder %s44, %s45
    %p54 = scmp.eq.s32.totalorder %s13, 0
    %p55 = por %p53, %p54
    %p56 = scmp.ne.s32.totalorder %s44, %s45
    %p57 = scmp.eq.s32.totalorder %s14, 1
    %p58 = por %p56, %p57
    %p60 = scmp.ne.s32.totalorder %s45, %s59
    %p61 = scmp.eq.s32.totalorder %s14, 0
    %p62 = por %p60, %p61
    %s63 = ssub.s32 %s8, %s15
    %p64 = scmp.eq.s32.totalorder %s63, 0
    %s66 = sadd.s32 %s65, 1
    %s67 = scalar_select %p64, %s65, %s66
    %p70 = pneg %p64
    %p71 = scmp.eq.s32.totalorder %s8, 1
    %p72 = por %p70, %p71
    %p73 = scmp.ne.s32.totalorder %s65, %s68
    %p74 = scmp.eq.s32.totalorder %s8, 0
    %p75 = por %p73, %p74
    %p76 = scmp.ne.s32.totalorder %s65, %s68
    %p77 = scmp.eq.s32.totalorder %s13, 1
    %p78 = por %p76, %p77
    %p79 = scmp.ne.s32.totalorder %s68, %s69
    %p80 = scmp.eq.s32.totalorder %s13, 0
    %p81 = por %p79, %p80
    %p82 = scmp.ne.s32.totalorder %s68, %s69
    %p83 = scmp.eq.s32.totalorder %s14, 1
    %p84 = por %p82, %p83
    %p86 = scmp.ne.s32.totalorder %s69, %s85
    %p87 = scmp.eq.s32.totalorder %s14, 0
    %p88 = por %p86, %p87
    %p89 = scmp.le.s32.totalorder 1, %s8
    %p90 = scmp.lt.s32.totalorder %s8, 3
    %p91 = pnand %p89, %p90
    %p92 = pneg %p91
    // Predicated region
    $region9: #{reusable_conv_block.3} parent=5 // pred_check
      _
    $region10: #{reusable_conv_block.3} parent=5 // pred_check_branch
      %94 = sbr.rel (%p91) target = $region12
    $region11: #{reusable_conv_block.3} parent=5 // pred_region
      %s95 = ssub.s32 %s8, 1
      // Predicated region
      $region13: #{reusable_conv_block.3} parent=11 // pred_check
        %p96 = pneg %p55
      $region14: #{reusable_conv_block.3} parent=11 // pred_check_branch
        %98 = sbr.rel (%p96) target = $region16
      $region15: #{reusable_conv_block.3} parent=11 // pred_region
        _
      $region16: #{reusable_conv_block.3} parent=11 // pred_fallthru
        _
    $region12: #{reusable_conv_block.3} parent=5 // pred_fallthru
      _
    %p99 = scmp.lt.s32.totalorder %s8, 2
    // Predicated region
    $region17: #{reusable_conv_block.3} parent=5 // pred_check
      %p100 = pneg %p99
    $region18: #{reusable_conv_block.3} parent=5 // pred_check_branch
      %102 = sbr.rel (%p100) target = $region20
    $region19: #{reusable_conv_block.3} parent=5 // pred_region
      // Predicated region
      $region21: #{reusable_conv_block.3} parent=19 // pred_check
        %p103 = pneg %p28
      $region22: #{reusable_conv_block.3} parent=19 // pred_check_branch
        %105 = sbr.rel (%p103) target = $region24
      $region23: #{reusable_conv_block.3} parent=19 // pred_region
        %s106 = smul.u32 2, %s8
        %p107 = scmp.lt.s32.totalorder %s106, 3
        %s108 = scalar_select %p107, %s106, 3
        %s109 = smul.addr %s108, 8
        %s110 = scalar_lea.vmem %s0, %s109
        %s111 = smul.u32 2, %s8
      $region24: #{reusable_conv_block.3} parent=19 // pred_fallthru
        _
    $region20: #{reusable_conv_block.3} parent=5 // pred_fallthru
      _
    %p112 = scmp.le.s32.totalorder 1, %s8
    %p113 = scmp.lt.s32.totalorder %s8, 3
    %p114 = pnand %p112, %p113
    %p115 = pneg %p114
    // Predicated region
    $region25: #{reusable_conv_block.3} parent=5 // pred_check
      _
    $region26: #{reusable_conv_block.3} parent=5 // pred_check_branch
      %117 = sbr.rel (%p114) target = $region28
    $region27: #{reusable_conv_block.3} parent=5 // pred_region
      %s118 = ssub.s32 %s8, 1
      %s119 = smul.u32 2, %s13
      %p120 = scmp.lt.s32.totalorder %s119, 3
      %s121 = scalar_select %p120, %s119, 3
      %s122 = smul.addr %s121, 8
      %s123 = scalar_lea.vmem %s0, %s122
      %p124 = pneg %p34
      %p125 = pneg %p31
      %p126 = pneg %p55
      %p127 = pneg %p52
      %p128 = pneg %p81
      %p129 = pneg %p78
      %s130 = smul.u32 2, %s13
      %p131 = scmp.lt.s32.totalorder %s130, 3
      %s132 = scalar_select %p131, %s130, 3
      %s133 = smul.addr %s132, 8
      %s134 = scalar_lea.vmem %s2, %s133
      %s135 = smul.u32 2, %s13
      %p136 = scmp.lt.s32.totalorder %s135, 3
      %s137 = scalar_select %p136, %s135, 3
      %s138 = smul.addr %s137, 8
      %s139 = scalar_lea.vmem %s0, %s138
      %s140 = smul.u32 2, %s13
      %s141 = smul.u32 2, %s13
      %p142 = scmp.lt.s32.totalorder %s141, 3
      %s143 = scalar_select %p142, %s141, 3
      %s144 = smul.addr %s143, 8
      %s145 = scalar_lea.vmem %s2, %s144
      %s146 = smul.u32 2, %s13
      %v147 = vld [vmem:[%s1] sm:$0x3]
      %v148 = vld [vmem:[%s139] sm:$0xff]
      %v149 = vld [vmem:[%s139 + $0x8] sm:$0xff]
      %v150 = vperm.slane %v147, 0
      %v151 = vmul.f32 %v148, %v150
      %v152 = vmul.f32 %v149, %v150
      %v153 = vperm.slane %v147, 1
      %v154 = vadd.f32 %v151, %v153
      %v155 = vadd.f32 %v152, %v153
      %156 = vst [vmem:[%s145] sm:$0xff] %v154
      %157 = vst [vmem:[%s145 + $0x8] sm:$0xff] %v155
      %s158 = smul.u32 2, %s13
      %p159 = scmp.lt.s32.totalorder %s158, 3
      %s160 = scalar_select %p159, %s158, 3
      %s161 = smul.addr %s160, 8
      %s162 = scalar_lea.vmem %s2, %s161
      // Predicated region
      $region29: #{reusable_conv_block.3} parent=27 // pred_check
        %p163 = pneg %p78
      $region30: #{reusable_conv_block.3} parent=27 // pred_check_branch
        %165 = sbr.rel (%p163) target = $region32
      $region31: #{reusable_conv_block.3} parent=27 // pred_region
        %s166 = smul.u32 2, %s13
      $region32: #{reusable_conv_block.3} parent=27 // pred_fallthru
        _
    $region28: #{reusable_conv_block.3} parent=5 // pred_fallthru
      _
    %p167 = scmp.le.s32.totalorder 2, %s8
    // Predicated region
    $region33: #{reusable_conv_block.3} parent=5 // pred_check
      %p168 = pneg %p167
    $region34: #{reusable_conv_block.3} parent=5 // pred_check_branch
      %170 = sbr.rel (%p168) target = $region36
    $region35: #{reusable_conv_block.3} parent=5 // pred_region
      %s171 = ssub.s32 %s8, 2
      // Predicated region
      $region37: #{reusable_conv_block.3} parent=35 // pred_check
        %p172 = pneg %p84
      $region38: #{reusable_conv_block.3} parent=35 // pred_check_branch
        %174 = sbr.rel (%p172) target = $region40
      $region39: #{reusable_conv_block.3} parent=35 // pred_region
        %s175 = smul.u32 2, %s14
        %p176 = scmp.lt.s32.totalorder %s175, 3
        %s177 = scalar_select %p176, %s175, 3
        %s178 = smul.addr %s177, 8
        %s179 = scalar_lea.vmem %s2, %s178
      $region40: #{reusable_conv_block.3} parent=35 // pred_fallthru
        _
    $region36: #{reusable_conv_block.3} parent=5 // pred_fallthru
      _
  $region6: #{reusable_conv_block.3} parent=0 // loop_footer
    %s12 = sadd.s32 1, %s8
  $region7: #{reusable_conv_block.3} parent=0 // loop_footer_branch
    %7 = sbr.rel target = $region3
  $region8: #{reusable_conv_block.3} parent=0 // loop_exit
    _

</llo_original>
